<compile_context>
chip_gen: v7x
topology: tpu7x:2x2x1
jax: 0.10.0
libtpu: 0.0.40
codegen_flags: <defaults>
</compile_context>

<pallas_src>
import jax
import jax.numpy as jnp
from jax import lax
from jax.experimental import pallas as pl
from jax.experimental.pallas import tpu as pltpu


# ---------------------------------------------------------------------------
# Kernel 1: HBM-bound streaming global pool (spatial SUM; 1/HW folded into the
# projection weight).  x is (B*C, HW), tiled (TR, THW); output accumulates in
# the resident (TR, 1) output block across the "arbitrary" reduction axis.
# ---------------------------------------------------------------------------
def _make_pool_kernel(thw, hw_total):
    needs_mask = (hw_total % thw) != 0          # static python condition

    def pool_kernel(x_ref, out_ref):
        k = pl.program_id(1)

        @pl.when(k == 0)
        def _init():
            out_ref[...] = jnp.zeros_like(out_ref)

        x = x_ref[...].astype(jnp.float32)      # no-op for f32 input; per-tile cast otherwise
        if needs_mask:
            col = k * thw + lax.broadcasted_iota(jnp.int32, x.shape, 1)
            x = jnp.where(col < hw_total, x, 0.0)
        out_ref[...] += jnp.sum(x, axis=-1, keepdims=True)   # (TR, 1) f32

    return pool_kernel


# ---------------------------------------------------------------------------
# Kernel 2: tiny epilogue -- stand-in backbone head (pooled @ wproj + b, ReLU)
# fused with fc + gather (per-row dot with the pre-gathered fc column).
# MXU operands stay bf16; accumulation is f32.
# ---------------------------------------------------------------------------
def _head_kernel(gap_ref, wproj_ref, bproj_ref, wsel_ref, bsel_ref, out_ref):
    gap = gap_ref[...]                                        # (B, C) f32 spatial sums
    feat = jnp.dot(gap.astype(jnp.bfloat16), wproj_ref[...],
                   preferred_element_type=jnp.float32) + bproj_ref[...]
    feat = jnp.maximum(feat, 0.0)                             # (B, F)
    sel = jnp.sum(feat * wsel_ref[...].astype(jnp.float32),
                  axis=-1, keepdims=True)                     # (B, 1)
    out_ref[...] = sel + bsel_ref[...]


# ---------------------------------------------------------------------------
# Tile chooser: (8,128)-aligned, VMEM-budget-checked, prefers >= 2 row tiles
# (v7x dual-TensorCore), then the biggest block, then the widest lane extent.
# ---------------------------------------------------------------------------
def _choose_tiles(n_rows, n_cols, elem_bytes, block_budget):
    SUB, LANE = 8, 128

    row_cands = [r for r in range(SUB, n_rows + 1, SUB) if n_rows % r == 0]
    if not row_cands:
        row_cands = [n_rows]                      # full extent (n_rows < 8 / not %8)

    if n_cols % LANE == 0:
        col_cands = [c for c in range(LANE, n_cols + 1, LANE) if n_cols % c == 0]
    else:
        col_cands = [n_cols]                      # full extent, no masked tail
        col_cands += [c for c in (LANE, 4 * LANE, 8 * LANE, 16 * LANE,
                                  32 * LANE, 64 * LANE) if c < n_cols]

    best = None
    for tr in row_cands:
        for thw in col_cands:
            if tr * thw * elem_bytes > block_budget:
                continue
            row_split = 1 if (n_rows // tr) >= 2 else 0       # feed both v7x TCs
            score = (row_split, tr * thw, thw)
            if best is None or score > best[0]:
                best = (score, tr, thw)
    if best is None:                              # nothing fits: smallest aligned tile
        return row_cands[0], min(col_cands)
    return best[1], best[2]


def product_feature_extractor(x, entity_type, wproj, bproj, wfc, bfc):
    """x: (B, C, H, W) NCHW, entity_type: (B,) int -> (B, 1) f32."""
    B, C, H, W = x.shape
    HW = H * W
    BC = B * C
    F = wproj.shape[1]

    # --- generation-aware VMEM budget -------------------------------------
    try:
        vmem_cap = int(pltpu.get_tpu_info().vmem_capacity_bytes)
    except Exception:
        vmem_cap = 64 * 1024 * 1024               # conservative default (v7x)
    block_budget = int(0.20 * vmem_cap)           # per x block; x is double-buffered
    vmem_limit = int(0.75 * vmem_cap)             # ~48 MiB on v7x, ~96 MiB on v5e/v6e

    # --- stage 1: stream x (native dtype, no materializing cast) and pool --
    x2d = x.reshape(BC, HW)                       # pure row-major reshape, no copy/cast
    TR, THW = _choose_tiles(BC, HW, x2d.dtype.itemsize, block_budget)
    grid = (pl.cdiv(BC, TR), pl.cdiv(HW, THW))

    pool_cost = pl.CostEstimate(
        flops=int(BC * HW),
        transcendentals=0,
        bytes_accessed=int(x2d.size * x2d.dtype.itemsize + BC * 4),
    )
    pooled = pl.pallas_call(
        _make_pool_kernel(THW, HW),
        out_shape=jax.ShapeDtypeStruct((BC, 1), jnp.float32),
        grid_spec=pltpu.PrefetchScalarGridSpec(
            num_scalar_prefetch=0,
            grid=grid,
            in_specs=[pl.BlockSpec((TR, THW), lambda i, k: (i, k))],
            out_specs=pl.BlockSpec((TR, 1), lambda i, k: (i, 0)),
        ),
        compiler_params=pltpu.CompilerParams(
            dimension_semantics=("parallel", "arbitrary"),
            vmem_limit_bytes=vmem_limit,
        ),
        cost_estimate=pool_cost,
    )(x2d)

    # --- stage 2: tiny head (proj + ReLU + fused fc/gather), one block -----
    gap = pooled.reshape(B, C)                                 # (B, C) spatial sums
    wproj_s = (wproj / HW).astype(jnp.bfloat16)                # fold 1/HW of the avg pool
    bproj_f = bproj.reshape(1, F).astype(jnp.float32)
    et = entity_type.astype(jnp.int32)
    wsel = wfc.T[et].astype(jnp.bfloat16)                      # (B, F) gathered fc columns
    bsel = bfc.reshape(-1)[et].reshape(B, 1).astype(jnp.float32)

    return pl.pallas_call(
        _head_kernel,
        out_shape=jax.ShapeDtypeStruct((B, 1), jnp.float32),
    )(gap, wproj_s, bproj_f, wsel, bsel)


def reference(x, entity_type, wproj, bproj, wfc, bfc):
    """Pure-f32 JAX reference (no bf16 mirroring -> realistic tolerance)."""
    B, C, H, W = x.shape
    gap = jnp.mean(x.reshape(B, C, H * W), axis=-1)
    feat = jnp.maximum(gap @ wproj + bproj.reshape(1, -1), 0.0)
    logits = feat @ wfc + bfc.reshape(1, -1)
    et = entity_type.astype(jnp.int32)[:, None]
    return jnp.take_along_axis(logits, et, axis=1)


if __name__ == "__main__":
    # Small, deterministic shapes consistent with the module's forward.
    B, C, H, W = 2, 4, 16, 16          # image batch (NCHW)
    NUM_FTRS = 256                     # stand-in for resnet50's 2048
    NUM_ENTITY_TYPES = 8

    key = jax.random.PRNGKey(0)
    kx, ke, k1, k2, k3, k4 = jax.random.split(key, 6)

    x = jax.random.normal(kx, (B, C, H, W), dtype=jnp.float32)
    entity_type = jax.random.randint(ke, (B,), 0, NUM_ENTITY_TYPES, dtype=jnp.int32)

    # Deterministic synthetic parameters (no checkpoint loading).
    wproj = jax.random.normal(k1, (C, NUM_FTRS), dtype=jnp.float32) * 0.1
    bproj = jax.random.normal(k2, (1, NUM_FTRS), dtype=jnp.float32) * 0.01
    wfc   = jax.random.normal(k3, (NUM_FTRS, NUM_ENTITY_TYPES), dtype=jnp.float32) * 0.05
    bfc   = jax.random.normal(k4, (1, NUM_ENTITY_TYPES), dtype=jnp.float32) * 0.01

    out = product_feature_extractor(x, entity_type, wproj, bproj, wfc, bfc)
    out = jax.block_until_ready(out)

    ref = reference(x, entity_type, wproj, bproj, wfc, bfc)
    assert out.shape == (B, 1), out.shape
    assert jnp.allclose(out, ref, atol=5e-3, rtol=5e-2), (out, ref)

    print("KERNEL_OK")
</pallas_src>

<mosaic_0001>
module attributes {stable_mosaic.version = 11 : i64} {
  func.func @pool_kernel(%arg0: i32, %arg1: i32, %arg2: memref<8x256xf32, #tpu.memory_space<vmem>>, %arg3: memref<8x1xf32, #tpu.memory_space<vmem>>) attributes {dimension_semantics = [#tpu.dimension_semantics<parallel>, #tpu.dimension_semantics<arbitrary>], iteration_bounds = array<i64: 1, 1>, scalar_prefetch = 0 : i64, scratch_operands = 0 : i64, tpu.core_type = #tpu.core_type<tc>, window_params = [{transform_indices = @transform_0, window_bounds = array<i64: 8, 256>}, {transform_indices = @transform_1, window_bounds = array<i64: 8, 1>}]} {
    %c0_i32 = arith.constant 0 : i32
    %0 = arith.cmpi eq, %arg1, %c0_i32 : i32
    %1 = arith.extui %0 : i1 to i32
    %c0_i32_0 = arith.constant 0 : i32
    %2 = arith.cmpi ne, %1, %c0_i32_0 : i32
    scf.if %2 {
      %cst_6 = arith.constant 0.000000e+00 : f32
      %9 = vector.broadcast %cst_6 : f32 to vector<8x1xf32>
      %c0_7 = arith.constant 0 : index
      %c0_8 = arith.constant 0 : index
      %10 = vector.load %arg3[%c0_7, %c0_8] : memref<8x1xf32, #tpu.memory_space<vmem>>, vector<8x1xf32>
      tpu.vector_store %arg3[%c0_7, %c0_8], %9 {strides = array<i32>} : memref<8x1xf32, #tpu.memory_space<vmem>>, vector<8x1xf32>,
    } else {
    }
    %c0 = arith.constant 0 : index
    %c0_1 = arith.constant 0 : index
    %3 = vector.load %arg2[%c0, %c0_1] : memref<8x256xf32, #tpu.memory_space<vmem>>, vector<8x256xf32>
    %c0_2 = arith.constant 0 : index
    %c0_3 = arith.constant 0 : index
    %4 = vector.load %arg3[%c0_2, %c0_3] : memref<8x1xf32, #tpu.memory_space<vmem>>, vector<8x1xf32>
    %cst = arith.constant dense<0.000000e+00> : vector<8xf32>
    %5 = vector.multi_reduction <add>, %3, %cst [1] : vector<8x256xf32> to vector<8xf32>
    %6 = vector.shape_cast %5 : vector<8xf32> to vector<8x1xf32>
    %7 = arith.addf %4, %6 : vector<8x1xf32>
    %c0_4 = arith.constant 0 : index
    %c0_5 = arith.constant 0 : index
    %8 = vector.load %arg3[%c0_4, %c0_5] : memref<8x1xf32, #tpu.memory_space<vmem>>, vector<8x1xf32>
    tpu.vector_store %arg3[%c0_4, %c0_5], %7 {strides = array<i32>} : memref<8x1xf32, #tpu.memory_space<vmem>>, vector<8x1xf32>,
    return
  }
  func.func @transform_0(%arg0: i32, %arg1: i32) -> (i32, i32) {
    %c0_i32 = arith.constant 0 : i32
    return %arg0, %arg1 : i32, i32
  }
  func.func @transform_1(%arg0: i32, %arg1: i32) -> (i32, i32) {
    %c0_i32 = arith.constant 0 : i32
    %c0_i32_0 = arith.constant 0 : i32
    return %arg0, %c0_i32 : i32, i32
  }
}

</mosaic_0001>

<llo_original>
// kernel: tpu_custom_call.1
$region0: #{tpu_custom_call.1}
  #allocation0 [shape = 'u32[]', space=smem, size = 0x4, offset = 0x4, fixed_abs, tag = 'smem constant byte address 0x4 - core index']
  #allocation1 [shape = 'u32[144,128]{1,0:T(1,128)}', space=vmem, size = 0x12000, scoped, tag = 'internal scratch']
  %s0 = inlined_call_operand.hbm [shape: f32[8,256], index: 0, kind: input, shape index: {}]
  %s1 = inlined_call_operand.vmem [shape: f32[8,1], index: 1, kind: output, shape index: {}]
  %s2 = sld [smem:[#allocation0]]
  $region22: #{tpu_custom_call.1} parent=0
    _
  %s4 = ssub.s32 1, %s2
  %s5 = scalar_select 0, %s4, %s2
  $region1: #{tpu_custom_call.1} parent=0
    #allocation2 [shape = 'u8[8192]{0}', space=vmem, size = 0x2000, scoped, tag = 'input window, operand 0, single buffered']
    #allocation3 [shape = 's32[1]{0}', space=sflag, size = 0x4, scoped, tag = 'scoped memory for tpu_custom_call.1']
    %6 = vsyncpa [#allocation3], 0
    // Predicated region
    $region2: #{tpu_custom_call.1} parent=1 // pred_check
      _
    $region3: #{tpu_custom_call.1} parent=1 // pred_check_branch
      %8 = sbr.rel (0) target = $region5
    $region4: #{tpu_custom_call.1} parent=1 // pred_region
      %s10 = ssub.s32 256, 256
      %11 = vsyncadd [#allocation3], %s10
      %s13 = sshll.u32 [#allocation2], 4
      %s14 = int_to_ptr.vmem [resolvable:$true] %s13
      %16 = dma.hbm_to_vmem [thread:$0]  %s0, 256, %s14, [#allocation3]
    $region5: #{tpu_custom_call.1} parent=1 // pred_fallthru
      _
    // Predicated region
    $region6: #{tpu_custom_call.1} parent=1 // pred_check
      _
    $region7: #{tpu_custom_call.1} parent=1 // pred_check_branch
      %18 = sbr.rel (0) target = $region9
    $region8: #{tpu_custom_call.1} parent=1 // pred_region
      %19 = dma.done [#allocation3], 256
    $region9: #{tpu_custom_call.1} parent=1 // pred_fallthru
      _
    %p20 = scmp.eq.s32.totalorder 0, 0
    // Predicated region
    $region10: #{tpu_custom_call.1} parent=1 // pred_check
      %p21 = pneg %p20
    $region11: #{tpu_custom_call.1} parent=1 // pred_check_branch
      %23 = sbr.rel (%p21) target = $region13
    $region12: #{tpu_custom_call.1} parent=1 // pred_region
      %vm24 = vcmask 7168
      %25 = vst.msk [vmem:[%s1] sm:$0xff] %vm24, 0.0
    $region13: #{tpu_custom_call.1} parent=1 // pred_fallthru
      _
    %v26 = vld [vmem:[#allocation2] sm:$0xff]
    %v27 = vld [vmem:[#allocation2 + $0x8] sm:$0xff]
    %v28 = vld [vmem:[%s1] sm:$0xff]
    %v29 = vadd.f32 %v26, %v27
    %30 = vadd.xlane.f32.xlu0 %v29
    %v31 = vpop.xlane.xlu0 %30
    %v32 = vadd.f32 %v28, %v31
    %vm33 = vcmask 7168
    %34 = vst.msk [vmem:[%s1] sm:$0xff] %vm33, %v32
    // Predicated region
    $region14: #{tpu_custom_call.1} parent=1 // pred_check
      _
    $region15: #{tpu_custom_call.1} parent=1 // pred_check_branch
      %36 = sbr.rel (0) target = $region17
    $region16: #{tpu_custom_call.1} parent=1 // pred_region
      _
    $region17: #{tpu_custom_call.1} parent=1 // pred_fallthru
      _
    // Predicated region
    $region18: #{tpu_custom_call.1} parent=1 // pred_check
      _
    $region19: #{tpu_custom_call.1} parent=1 // pred_check_branch
      %38 = sbr.rel (0) target = $region21
    $region20: #{tpu_custom_call.1} parent=1 // pred_region
      _
    $region21: #{tpu_custom_call.1} parent=1 // pred_fallthru
      _
    %39 = vsyncpa [#allocation3], 1

</llo_original>
